<compile_context>
chip_gen: v6e
topology: v6e:2x2x1
jax: 0.10.0
libtpu: 0.0.40
codegen_flags: <defaults>
</compile_context>

<pallas_src>
import jax
import jax.numpy as jnp
from jax.experimental import pallas as pl
from jax.experimental.pallas import tpu as pltpu

INPUT_DIM = 256
HIDDEN_DIM = 10
MID_DIM = 128
HIDDEN_PAD = 128                 # lane-dense padded latent width (compute only)
TILE_B_MAX = 2048                # ~16 MiB of double-buffered VMEM at f32
VMEM_LIMIT_BYTES = 40 * 1024 * 1024


def _round_up(n, m):
    return (n + m - 1) // m * m


def _choose_tiling(B):
    """Pick (tile_b, n_tiles, b_pad) with minimal padding and >=2 even tiles
    when the batch is big enough (so v7x's two TensorCores both get work)."""
    b_pad8 = _round_up(max(B, 1), 8)
    if b_pad8 <= 8:
        return b_pad8, 1, b_pad8
    n_tiles = max(2, pl.cdiv(b_pad8, TILE_B_MAX))
    if n_tiles % 2:
        n_tiles += 1             # even tile count: neither core idles on the tail
    tile_b = _round_up(pl.cdiv(b_pad8, n_tiles), 8)
    return tile_b, n_tiles, tile_b * n_tiles


def _ae_kernel(x_ref,
               w1_ref, b1_ref,   # encoder Linear(input_dim -> 128)
               w2_ref, b2_ref,   # encoder Linear(128 -> hidden_pad), zero-padded cols
               w3_ref, b3_ref,   # decoder Linear(hidden_pad -> 128), zero-padded rows
               w4_ref, b4_ref,   # decoder Linear(128 -> input_dim)
               out_ref, h_ref):
    x = x_ref[...]

    # encoder: Linear -> ReLU -> Linear
    e1 = jnp.dot(x, w1_ref[...], preferred_element_type=jnp.float32) + b1_ref[...]
    e1 = jnp.maximum(e1, 0.0)
    h_pad = jnp.dot(e1, w2_ref[...], preferred_element_type=jnp.float32) + b2_ref[...]

    # decoder: Linear -> ReLU -> Linear  (padded latent cols are exactly zero)
    d1 = jnp.dot(h_pad, w3_ref[...], preferred_element_type=jnp.float32) + b3_ref[...]
    d1 = jnp.maximum(d1, 0.0)
    out = jnp.dot(d1, w4_ref[...], preferred_element_type=jnp.float32) + b4_ref[...]

    out_ref[...] = out.astype(out_ref.dtype)
    # Write only the true 10-wide latent to HBM (no padded-zero writeback).
    h_ref[...] = h_pad[:, :HIDDEN_DIM].astype(h_ref.dtype)


def prepare_params(params):
    """One-time padding of the latent dimension to 128 for lane-dense MXU tiles."""
    w1t, b1, w2t, b2, w3t, b3, w4t, b4 = params
    w2p = jnp.pad(w2t, ((0, 0), (0, HIDDEN_PAD - HIDDEN_DIM)))
    b2p = jnp.pad(b2, ((0, 0), (0, HIDDEN_PAD - HIDDEN_DIM)))
    w3p = jnp.pad(w3t, ((0, HIDDEN_PAD - HIDDEN_DIM), (0, 0)))
    return (w1t, b1, w2p, b2p, w3p, b3, w4t, b4)


@jax.jit
def autoencoder_forward(x, prepped_params):
    """x: (B, INPUT_DIM) float32. Returns (out, h) matching the PyTorch module."""
    B = x.shape[0]
    w1t, b1, w2p, b2p, w3p, b3, w4t, b4 = prepped_params

    tile_b, n_tiles, b_pad = _choose_tiling(B)
    if b_pad != B:
        x = jnp.pad(x, ((0, b_pad - B), (0, 0)))

    batch_spec = lambda cols: pl.BlockSpec((tile_b, cols), lambda i: (i, 0))
    const_spec = lambda shape: pl.BlockSpec(shape, lambda i: (0, 0))

    out, h = pl.pallas_call(
        _ae_kernel,
        out_shape=(
            jax.ShapeDtypeStruct((b_pad, INPUT_DIM), jnp.float32),
            jax.ShapeDtypeStruct((b_pad, HIDDEN_DIM), jnp.float32),
        ),
        grid=(n_tiles,),
        in_specs=[
            batch_spec(INPUT_DIM),                                     # x tile
            const_spec((INPUT_DIM, MID_DIM)), const_spec((1, MID_DIM)),
            const_spec((MID_DIM, HIDDEN_PAD)), const_spec((1, HIDDEN_PAD)),
            const_spec((HIDDEN_PAD, MID_DIM)), const_spec((1, MID_DIM)),
            const_spec((MID_DIM, INPUT_DIM)), const_spec((1, INPUT_DIM)),
        ],
        out_specs=[
            batch_spec(INPUT_DIM),                                     # out tile
            batch_spec(HIDDEN_DIM),                                    # h tile (true width)
        ],
        compiler_params=pltpu.CompilerParams(
            dimension_semantics=("parallel",),
            vmem_limit_bytes=VMEM_LIMIT_BYTES,
        ),
    )(x, w1t, b1, w2p, b2p, w3p, b3, w4t, b4)

    if b_pad != B:
        out = out[:B]
        h = h[:B]
    return out, h


def init_params(key):
    """Deterministic init mirroring torch.nn.Linear's U(-1/sqrt(fan_in), +1/sqrt(fan_in))."""
    def linear(key, fan_in, fan_out):
        kw, kb = jax.random.split(key)
        bound = 1.0 / jnp.sqrt(fan_in)
        # store weight already transposed: (fan_in, fan_out)
        w_t = jax.random.uniform(kw, (fan_in, fan_out), jnp.float32, -bound, bound)
        b = jax.random.uniform(kb, (1, fan_out), jnp.float32, -bound, bound)
        return w_t, b

    k1, k2, k3, k4 = jax.random.split(key, 4)
    w1t, b1 = linear(k1, INPUT_DIM, MID_DIM)
    w2t, b2 = linear(k2, MID_DIM, HIDDEN_DIM)
    w3t, b3 = linear(k3, HIDDEN_DIM, MID_DIM)
    w4t, b4 = linear(k4, MID_DIM, INPUT_DIM)
    return (w1t, b1, w2t, b2, w3t, b3, w4t, b4)


def reference_forward(x, params):
    w1t, b1, w2t, b2, w3t, b3, w4t, b4 = params
    e1 = jnp.maximum(x @ w1t + b1, 0.0)
    h = e1 @ w2t + b2
    d1 = jnp.maximum(h @ w3t + b3, 0.0)
    out = d1 @ w4t + b4
    return out, h


if __name__ == "__main__":
    key = jax.random.PRNGKey(0)
    kp, kx = jax.random.split(key)
    params = init_params(kp)
    prepped = prepare_params(params)   # one-time latent padding

    # Small single-tile batch.
    B = 8
    x = jax.random.normal(kx, (B, INPUT_DIM), jnp.float32)
    out, h = jax.block_until_ready(autoencoder_forward(x, prepped))
    out_ref, h_ref = reference_forward(x, params)
    assert out.shape == (B, INPUT_DIM) and h.shape == (B, HIDDEN_DIM)
    assert jnp.allclose(out, out_ref, atol=1e-4, rtol=1e-4)
    assert jnp.allclose(h, h_ref, atol=1e-4, rtol=1e-4)

    # Multi-tile path (2 tiles, adaptive tile size, small batch padding).
    kx2 = jax.random.fold_in(kx, 1)
    B2 = 300   # not a multiple of 8 -> exercises the pad/slice + 2-tile path
    x2 = jax.random.normal(kx2, (B2, INPUT_DIM), jnp.float32)
    out2, h2 = jax.block_until_ready(autoencoder_forward(x2, prepped))
    out2_ref, h2_ref = reference_forward(x2, params)
    assert out2.shape == (B2, INPUT_DIM) and h2.shape == (B2, HIDDEN_DIM)
    assert jnp.allclose(out2, out2_ref, atol=1e-4, rtol=1e-4)
    assert jnp.allclose(h2, h2_ref, atol=1e-4, rtol=1e-4)

    print("KERNEL_OK")
</pallas_src>

<mosaic_0001>
module attributes {stable_mosaic.version = 11 : i64} {
  func.func @_ae_kernel(%arg0: i32, %arg1: memref<8x256xf32, #tpu.memory_space<vmem>>, %arg2: memref<256x128xf32, #tpu.memory_space<vmem>>, %arg3: memref<1x128xf32, #tpu.memory_space<vmem>>, %arg4: memref<128x128xf32, #tpu.memory_space<vmem>>, %arg5: memref<1x128xf32, #tpu.memory_space<vmem>>, %arg6: memref<128x128xf32, #tpu.memory_space<vmem>>, %arg7: memref<1x128xf32, #tpu.memory_space<vmem>>, %arg8: memref<128x256xf32, #tpu.memory_space<vmem>>, %arg9: memref<1x256xf32, #tpu.memory_space<vmem>>, %arg10: memref<8x256xf32, #tpu.memory_space<vmem>>, %arg11: memref<8x10xf32, #tpu.memory_space<vmem>>) attributes {dimension_semantics = [#tpu.dimension_semantics<parallel>], iteration_bounds = array<i64: 1>, scalar_prefetch = 0 : i64, scratch_operands = 0 : i64, tpu.core_type = #tpu.core_type<tc>, window_params = [{transform_indices = @transform_0, window_bounds = array<i64: 8, 256>}, {pipeline_mode = #tpu.pipeline_mode<synchronous>, transform_indices = @transform_1, window_bounds = array<i64: 256, 128>}, {pipeline_mode = #tpu.pipeline_mode<synchronous>, transform_indices = @transform_2, window_bounds = array<i64: 1, 128>}, {pipeline_mode = #tpu.pipeline_mode<synchronous>, transform_indices = @transform_3, window_bounds = array<i64: 128, 128>}, {pipeline_mode = #tpu.pipeline_mode<synchronous>, transform_indices = @transform_4, window_bounds = array<i64: 1, 128>}, {pipeline_mode = #tpu.pipeline_mode<synchronous>, transform_indices = @transform_5, window_bounds = array<i64: 128, 128>}, {pipeline_mode = #tpu.pipeline_mode<synchronous>, transform_indices = @transform_6, window_bounds = array<i64: 1, 128>}, {pipeline_mode = #tpu.pipeline_mode<synchronous>, transform_indices = @transform_7, window_bounds = array<i64: 128, 256>}, {pipeline_mode = #tpu.pipeline_mode<synchronous>, transform_indices = @transform_8, window_bounds = array<i64: 1, 256>}, {transform_indices = @transform_9, window_bounds = array<i64: 8, 256>}, {transform_indices = @transform_10, window_bounds = array<i64: 8, 10>}]} {
    %c0 = arith.constant 0 : index
    %c0_0 = arith.constant 0 : index
    %0 = vector.load %arg1[%c0, %c0_0] : memref<8x256xf32, #tpu.memory_space<vmem>>, vector<8x256xf32>
    %c0_1 = arith.constant 0 : index
    %c0_2 = arith.constant 0 : index
    %1 = vector.load %arg2[%c0_1, %c0_2] : memref<256x128xf32, #tpu.memory_space<vmem>>, vector<256x128xf32>
    %cst = arith.constant dense<0.000000e+00> : vector<8x128xf32>
    %2 = tpu.matmul %0, %1, %cst {dimension_numbers = #tpu.dot_dimension_numbers<[1], [0], [0], [1], [0, 0, 1, 1], [], []>} : vector<8x256xf32>, vector<256x128xf32>, vector<8x128xf32> -> vector<8x128xf32>
    %c0_3 = arith.constant 0 : index
    %c0_4 = arith.constant 0 : index
    %3 = vector.load %arg3[%c0_3, %c0_4] : memref<1x128xf32, #tpu.memory_space<vmem>>, vector<1x128xf32>
    %4 = vector.broadcast %3 : vector<1x128xf32> to vector<8x128xf32>
    %5 = arith.addf %2, %4 : vector<8x128xf32>
    %cst_5 = arith.constant 0.000000e+00 : f32
    %6 = vector.broadcast %cst_5 : f32 to vector<8x128xf32>
    %7 = arith.maximumf %5, %6 : vector<8x128xf32>
    %c0_6 = arith.constant 0 : index
    %c0_7 = arith.constant 0 : index
    %8 = vector.load %arg4[%c0_6, %c0_7] : memref<128x128xf32, #tpu.memory_space<vmem>>, vector<128x128xf32>
    %cst_8 = arith.constant dense<0.000000e+00> : vector<8x128xf32>
    %9 = tpu.matmul %7, %8, %cst_8 {dimension_numbers = #tpu.dot_dimension_numbers<[1], [0], [0], [1], [0, 0, 1, 1], [], []>} : vector<8x128xf32>, vector<128x128xf32>, vector<8x128xf32> -> vector<8x128xf32>
    %c0_9 = arith.constant 0 : index
    %c0_10 = arith.constant 0 : index
    %10 = vector.load %arg5[%c0_9, %c0_10] : memref<1x128xf32, #tpu.memory_space<vmem>>, vector<1x128xf32>
    %11 = vector.broadcast %10 : vector<1x128xf32> to vector<8x128xf32>
    %12 = arith.addf %9, %11 : vector<8x128xf32>
    %c0_11 = arith.constant 0 : index
    %c0_12 = arith.constant 0 : index
    %13 = vector.load %arg6[%c0_11, %c0_12] : memref<128x128xf32, #tpu.memory_space<vmem>>, vector<128x128xf32>
    %cst_13 = arith.constant dense<0.000000e+00> : vector<8x128xf32>
    %14 = tpu.matmul %12, %13, %cst_13 {dimension_numbers = #tpu.dot_dimension_numbers<[1], [0], [0], [1], [0, 0, 1, 1], [], []>} : vector<8x128xf32>, vector<128x128xf32>, vector<8x128xf32> -> vector<8x128xf32>
    %c0_14 = arith.constant 0 : index
    %c0_15 = arith.constant 0 : index
    %15 = vector.load %arg7[%c0_14, %c0_15] : memref<1x128xf32, #tpu.memory_space<vmem>>, vector<1x128xf32>
    %16 = vector.broadcast %15 : vector<1x128xf32> to vector<8x128xf32>
    %17 = arith.addf %14, %16 : vector<8x128xf32>
    %cst_16 = arith.constant 0.000000e+00 : f32
    %18 = vector.broadcast %cst_16 : f32 to vector<8x128xf32>
    %19 = arith.maximumf %17, %18 : vector<8x128xf32>
    %c0_17 = arith.constant 0 : index
    %c0_18 = arith.constant 0 : index
    %20 = vector.load %arg8[%c0_17, %c0_18] : memref<128x256xf32, #tpu.memory_space<vmem>>, vector<128x256xf32>
    %cst_19 = arith.constant dense<0.000000e+00> : vector<8x256xf32>
    %21 = tpu.matmul %19, %20, %cst_19 {dimension_numbers = #tpu.dot_dimension_numbers<[1], [0], [0], [1], [0, 0, 1, 1], [], []>} : vector<8x128xf32>, vector<128x256xf32>, vector<8x256xf32> -> vector<8x256xf32>
    %c0_20 = arith.constant 0 : index
    %c0_21 = arith.constant 0 : index
    %22 = vector.load %arg9[%c0_20, %c0_21] : memref<1x256xf32, #tpu.memory_space<vmem>>, vector<1x256xf32>
    %23 = vector.broadcast %22 : vector<1x256xf32> to vector<8x256xf32>
    %24 = arith.addf %21, %23 : vector<8x256xf32>
    %c0_22 = arith.constant 0 : index
    %c0_23 = arith.constant 0 : index
    %25 = vector.load %arg10[%c0_22, %c0_23] : memref<8x256xf32, #tpu.memory_space<vmem>>, vector<8x256xf32>
    tpu.vector_store %arg10[%c0_22, %c0_23], %24 {strides = array<i32>} : memref<8x256xf32, #tpu.memory_space<vmem>>, vector<8x256xf32>,
    %26 = vector.extract_strided_slice %12 {offsets = [0, 0], sizes = [8, 10], strides = [1, 1]} : vector<8x128xf32> to vector<8x10xf32>
    %c0_24 = arith.constant 0 : index
    %c0_25 = arith.constant 0 : index
    %27 = vector.load %arg11[%c0_24, %c0_25] : memref<8x10xf32, #tpu.memory_space<vmem>>, vector<8x10xf32>
    tpu.vector_store %arg11[%c0_24, %c0_25], %26 {strides = array<i32>} : memref<8x10xf32, #tpu.memory_space<vmem>>, vector<8x10xf32>,
    return
  }
  func.func @transform_0(%arg0: i32) -> (i32, i32) {
    %c0_i32 = arith.constant 0 : i32
    %c0_i32_0 = arith.constant 0 : i32
    return %arg0, %c0_i32 : i32, i32
  }
  func.func @transform_1(%arg0: i32) -> (i32, i32) {
    %c0_i32 = arith.constant 0 : i32
    %c0_i32_0 = arith.constant 0 : i32
    %c0_i32_1 = arith.constant 0 : i32
    return %c0_i32, %c0_i32_0 : i32, i32
  }
  func.func @transform_2(%arg0: i32) -> (i32, i32) {
    %c0_i32 = arith.constant 0 : i32
    %c0_i32_0 = arith.constant 0 : i32
    %c0_i32_1 = arith.constant 0 : i32
    return %c0_i32, %c0_i32_0 : i32, i32
  }
  func.func @transform_3(%arg0: i32) -> (i32, i32) {
    %c0_i32 = arith.constant 0 : i32
    %c0_i32_0 = arith.constant 0 : i32
    %c0_i32_1 = arith.constant 0 : i32
    return %c0_i32, %c0_i32_0 : i32, i32
  }
  func.func @transform_4(%arg0: i32) -> (i32, i32) {
    %c0_i32 = arith.constant 0 : i32
    %c0_i32_0 = arith.constant 0 : i32
    %c0_i32_1 = arith.constant 0 : i32
    return %c0_i32, %c0_i32_0 : i32, i32
  }
  func.func @transform_5(%arg0: i32) -> (i32, i32) {
    %c0_i32 = arith.constant 0 : i32
    %c0_i32_0 = arith.constant 0 : i32
    %c0_i32_1 = arith.constant 0 : i32
    return %c0_i32, %c0_i32_0 : i32, i32
  }
  func.func @transform_6(%arg0: i32) -> (i32, i32) {
    %c0_i32 = arith.constant 0 : i32
    %c0_i32_0 = arith.constant 0 : i32
    %c0_i32_1 = arith.constant 0 : i32
    return %c0_i32, %c0_i32_0 : i32, i32
  }
  func.func @transform_7(%arg0: i32) -> (i32, i32) {
    %c0_i32 = arith.constant 0 : i32
    %c0_i32_0 = arith.constant 0 : i32
    %c0_i32_1 = arith.constant 0 : i32
    return %c0_i32, %c0_i32_0 : i32, i32
  }
  func.func @transform_8(%arg0: i32) -> (i32, i32) {
    %c0_i32 = arith.constant 0 : i32
    %c0_i32_0 = arith.constant 0 : i32
    %c0_i32_1 = arith.constant 0 : i32
    return %c0_i32, %c0_i32_0 : i32, i32
  }
  func.func @transform_9(%arg0: i32) -> (i32, i32) {
    %c0_i32 = arith.constant 0 : i32
    %c0_i32_0 = arith.constant 0 : i32
    return %arg0, %c0_i32 : i32, i32
  }
  func.func @transform_10(%arg0: i32) -> (i32, i32) {
    %c0_i32 = arith.constant 0 : i32
    %c0_i32_0 = arith.constant 0 : i32
    return %arg0, %c0_i32 : i32, i32
  }
}

</mosaic_0001>

<llo_original>
// kernel: autoencoder_forward.1
$region0: #{autoencoder_forward.1}
  #allocation0 [shape = 'u32[]', space=smem, size = 0x4, offset = 0x4, fixed_abs, tag = 'smem constant byte address 0x4 - core index']
  #allocation1 [shape = 'u32[144,128]{1,0:T(1,128)}', space=vmem, size = 0x12000, scoped, tag = 'internal scratch']
  %s0 = inlined_call_operand.hbm [shape: f32[8,256], index: 0, kind: input, shape index: {}]
  %s1 = inlined_call_operand.hbm [shape: f32[256,128], index: 1, kind: input, shape index: {}]
  %s2 = inlined_call_operand.vmem [shape: f32[1,128], index: 2, kind: input, shape index: {}]
  %s3 = inlined_call_operand.hbm [shape: f32[128,128], index: 3, kind: input, shape index: {}]
  %s4 = inlined_call_operand.vmem [shape: f32[1,128], index: 4, kind: input, shape index: {}]
  %s5 = inlined_call_operand.hbm [shape: f32[128,128], index: 5, kind: input, shape index: {}]
  %s6 = inlined_call_operand.vmem [shape: f32[1,128], index: 6, kind: input, shape index: {}]
  %s7 = inlined_call_operand.hbm [shape: f32[128,256], index: 7, kind: input, shape index: {}]
  %s8 = inlined_call_operand.vmem [shape: f32[1,256], index: 8, kind: input, shape index: {}]
  %s9 = inlined_call_operand.hbm [shape: f32[8,256], index: 9, kind: output, shape index: {0}]
  %s10 = inlined_call_operand.hbm [shape: f32[8,10], index: 10, kind: output, shape index: {1}]
  %11 = xla_tuple %s9, %s10
  %s12 = sld [smem:[#allocation0]]
  $region74: #{autoencoder_forward.1} parent=0
    _
  %s14 = ssub.s32 1, %s12
  %s15 = scalar_select 0, %s14, %s12
  $region1: #{autoencoder_forward.1} parent=0
    #allocation2 [shape = 'u8[8192]{0}', space=vmem, size = 0x2000, scoped, tag = 'input window, operand 0, single buffered']
    #allocation3 [shape = 's32[1]{0}', space=sflag, size = 0x4, scoped, tag = 'scoped memory for autoencoder_forward.1']
    #allocation4 [shape = 's32[1]{0}', space=sflag, size = 0x4, scoped, tag = 'scoped memory for autoencoder_forward.1']
    #allocation5 [shape = 'u8[131072]{0}', space=vmem, size = 0x20000, scoped, tag = 'input window, operand 1, single buffered']
    #allocation6 [shape = 's32[1]{0}', space=sflag, size = 0x4, scoped, tag = 'scoped memory for autoencoder_forward.1']
    #allocation7 [shape = 'u8[65536]{0}', space=vmem, size = 0x10000, scoped, tag = 'input window, operand 3, single buffered']
    #allocation8 [shape = 'u8[65536]{0}', space=vmem, size = 0x10000, scoped, tag = 'input window, operand 5, single buffered']
    #allocation9 [shape = 's32[1]{0}', space=sflag, size = 0x4, scoped, tag = 'scoped memory for autoencoder_forward.1']
    #allocation10 [shape = 'u8[131072]{0}', space=vmem, size = 0x20000, scoped, tag = 'input window, operand 7, single buffered']
    #allocation11 [shape = 'u8[8192]{0}', space=vmem, size = 0x2000, scoped, tag = 'output window, operand 0, single buffered']
    #allocation12 [shape = 'u8[4096]{0}', space=vmem, size = 0x1000, scoped, tag = 'output window, operand 1, single buffered']
    #allocation13 [shape = 's32[1]{0}', space=sflag, size = 0x4, scoped, tag = 'scoped memory for autoencoder_forward.1']
    %16 = vsyncpa [#allocation3], 0
    %17 = vsyncpa [#allocation6], 0
    %18 = vsyncpa [#allocation9], 0
    %19 = vsyncpa [#allocation4], 0
    %20 = vsyncpa [#allocation13], 0
    // Predicated region
    $region2: #{autoencoder_forward.1} parent=1 // pred_check
      _
    $region3: #{autoencoder_forward.1} parent=1 // pred_check_branch
      %22 = sbr.rel (0) target = $region5
    $region4: #{autoencoder_forward.1} parent=1 // pred_region
      %s24 = ssub.s32 256, 256
      %25 = vsyncadd [#allocation3], %s24
      %s27 = sshll.u32 [#allocation2], 4
      %s28 = int_to_ptr.vmem [resolvable:$true] %s27
      %30 = dma.hbm_to_vmem [thread:$0]  %s0, 256, %s28, [#allocation3]
    $region5: #{autoencoder_forward.1} parent=1 // pred_fallthru
      _
    // Predicated region
    $region6: #{autoencoder_forward.1} parent=1 // pred_check
      _
    $region7: #{autoencoder_forward.1} parent=1 // pred_check_branch
      %32 = sbr.rel (0) target = $region9
    $region8: #{autoencoder_forward.1} parent=1 // pred_region
      %s34 = ssub.s32 4096, 4096
      %35 = vsyncadd [#allocation6], %s34
      %s36 = sshll.u32 [#allocation5], 4
      %s37 = int_to_ptr.vmem [resolvable:$true] %s36
      %42 = dma.hbm_to_vmem [thread:$0]  %s1, 4096, %s37, [#allocation6], 128, 128, 8
    $region9: #{autoencoder_forward.1} parent=1 // pred_fallthru
      _
    // Predicated region
    $region10: #{autoencoder_forward.1} parent=1 // pred_check
      _
    $region11: #{autoencoder_forward.1} parent=1 // pred_check_branch
      %44 = sbr.rel (0) target = $region13
    $region12: #{autoencoder_forward.1} parent=1 // pred_region
      _
    $region13: #{autoencoder_forward.1} parent=1 // pred_fallthru
      _
    // Predicated region
    $region14: #{autoencoder_forward.1} parent=1 // pred_check
      _
    $region15: #{autoencoder_forward.1} parent=1 // pred_check_branch
      %46 = sbr.rel (0) target = $region17
    $region16: #{autoencoder_forward.1} parent=1 // pred_region
      %s48 = ssub.s32 2048, 2048
      %49 = vsyncadd [#allocation6], %s48
      %s50 = sshll.u32 [#allocation7], 4
      %s51 = int_to_ptr.vmem [resolvable:$true] %s50
      %56 = dma.hbm_to_vmem [thread:$0]  %s3, 2048, %s51, [#allocation6], 128, 128, 8
    $region17: #{autoencoder_forward.1} parent=1 // pred_fallthru
      _
    // Predicated region
    $region18: #{autoencoder_forward.1} parent=1 // pred_check
      _
    $region19: #{autoencoder_forward.1} parent=1 // pred_check_branch
      %58 = sbr.rel (0) target = $region21
    $region20: #{autoencoder_forward.1} parent=1 // pred_region
      _
    $region21: #{autoencoder_forward.1} parent=1 // pred_fallthru
      _
    // Predicated region
    $region22: #{autoencoder_forward.1} parent=1 // pred_check
      _
    $region23: #{autoencoder_forward.1} parent=1 // pred_check_branch
      %60 = sbr.rel (0) target = $region25
    $region24: #{autoencoder_forward.1} parent=1 // pred_region
      %s62 = ssub.s32 2048, 2048
      %63 = vsyncadd [#allocation9], %s62
      %s64 = sshll.u32 [#allocation8], 4
      %s65 = int_to_ptr.vmem [resolvable:$true] %s64
      %70 = dma.hbm_to_vmem [thread:$0]  %s5, 2048, %s65, [#allocation9], 128, 128, 8
    $region25: #{autoencoder_forward.1} parent=1 // pred_fallthru
      _
    // Predicated region
    $region26: #{autoencoder_forward.1} parent=1 // pred_check
      _
    $region27: #{autoencoder_forward.1} parent=1 // pred_check_branch
      %72 = sbr.rel (0) target = $region29
    $region28: #{autoencoder_forward.1} parent=1 // pred_region
      _
    $region29: #{autoencoder_forward.1} parent=1 // pred_fallthru
      _
    // Predicated region
    $region30: #{autoencoder_forward.1} parent=1 // pred_check
      _
    $region31: #{autoencoder_forward.1} parent=1 // pred_check_branch
      %74 = sbr.rel (0) target = $region33
    $region32: #{autoencoder_forward.1} parent=1 // pred_region
      %s76 = ssub.s32 4096, 4096
      %77 = vsyncadd [#allocation9], %s76
      %s78 = sshll.u32 [#allocation10], 4
      %s79 = int_to_ptr.vmem [resolvable:$true] %s78
      %84 = dma.hbm_to_vmem [thread:$0]  %s7, 4096, %s79, [#allocation9], 256, 256, 16
    $region33: #{autoencoder_forward.1} parent=1 // pred_fallthru
      _
    // Predicated region
    $region34: #{autoencoder_forward.1} parent=1 // pred_check
      _
    $region35: #{autoencoder_forward.1} parent=1 // pred_check_branch
      %86 = sbr.rel (0) target = $region37
    $region36: #{autoencoder_forward.1} parent=1 // pred_region
      _
    $region37: #{autoencoder_forward.1} parent=1 // pred_fallthru
      _
    // Predicated region
    $region38: #{autoencoder_forward.1} parent=1 // pred_check
      _
    $region39: #{autoencoder_forward.1} parent=1 // pred_check_branch
      %88 = sbr.rel (0) target = $region41
    $region40: #{autoencoder_forward.1} parent=1 // pred_region
      %89 = dma.done [#allocation3], 256
    $region41: #{autoencoder_forward.1} parent=1 // pred_fallthru
      _
    // Predicated region
    $region42: #{autoencoder_forward.1} parent=1 // pred_check
      _
    $region43: #{autoencoder_forward.1} parent=1 // pred_check_branch
      %91 = sbr.rel (0) target = $region45
    $region44: #{autoencoder_forward.1} parent=1 // pred_region
      %92 = dma.done [#allocation6], 4096
    $region45: #{autoencoder_forward.1} parent=1 // pred_fallthru
      _
    // Predicated region
    $region46: #{autoencoder_forward.1} parent=1 // pred_check
      _
    $region47: #{autoencoder_forward.1} parent=1 // pred_check_branch
      %94 = sbr.rel (0) target = $region49
    $region48: #{autoencoder_forward.1} parent=1 // pred_region
      %95 = dma.done [#allocation6], 2048
    $region49: #{autoencoder_forward.1} parent=1 // pred_fallthru
      _
    // Predicated region
    $region50: #{autoencoder_forward.1} parent=1 // pred_check
      _
    $region51: #{autoencoder_forward.1} parent=1 // pred_check_branch
      %97 = sbr.rel (0) target = $region53
    $region52: #{autoencoder_forward.1} parent=1 // pred_region
      %98 = dma.done [#allocation9], 2048
    $region53: #{autoencoder_forward.1} parent=1 // pred_fallthru
      _
    // Predicated region
    $region54: #{autoencoder_forward.1} parent=1 // pred_check
      _
    $region55: #{autoencoder_forward.1} parent=1 // pred_check_branch
      %100 = sbr.rel (0) target = $region57
    $region56: #{autoencoder_forward.1} parent=1 // pred_region
      %101 = dma.done [#allocation9], 4096
    $region57: #{autoencoder_forward.1} parent=1 // pred_fallthru
      _
    %v102 = vld [vmem:[#allocation2] sm:$0xff]
    %v103 = vld [vmem:[#allocation2 + $0x8] sm:$0xff]
    %v104 = vld [vmem:[#allocation5] sm:$0xff]
    %v105 = vld [vmem:[#allocation5 + $0x8] sm:$0xff]
    %v106 = vld [vmem:[#allocation5 + $0x10] sm:$0xff]
    %v107 = vld [vmem:[#allocation5 + $0x18] sm:$0xff]
    %v108 = vld [vmem:[#allocation5 + $0x20] sm:$0xff]
    %v109 = vld [vmem:[#allocation5 + $0x28] sm:$0xff]
    %v110 = vld [vmem:[#allocation5 + $0x30] sm:$0xff]
    %v111 = vld [vmem:[#allocation5 + $0x38] sm:$0xff]
    %v112 = vld [vmem:[#allocation5 + $0x40] sm:$0xff]
    %v113 = vld [vmem:[#allocation5 + $0x48] sm:$0xff]
    %v114 = vld [vmem:[#allocation5 + $0x50] sm:$0xff]
    %v115 = vld [vmem:[#allocation5 + $0x58] sm:$0xff]
    %v116 = vld [vmem:[#allocation5 + $0x60] sm:$0xff]
    %v117 = vld [vmem:[#allocation5 + $0x68] sm:$0xff]
    %v118 = vld [vmem:[#allocation5 + $0x70] sm:$0xff]
    %v119 = vld [vmem:[#allocation5 + $0x78] sm:$0xff]
    %v120 = vld [vmem:[#allocation5 + $0x80] sm:$0xff]
    %v121 = vld [vmem:[#allocation5 + $0x88] sm:$0xff]
    %v122 = vld [vmem:[#allocation5 + $0x90] sm:$0xff]
    %v123 = vld [vmem:[#allocation5 + $0x98] sm:$0xff]
    %v124 = vld [vmem:[#allocation5 + $0xa0] sm:$0xff]
    %v125 = vld [vmem:[#allocation5 + $0xa8] sm:$0xff]
    %v126 = vld [vmem:[#allocation5 + $0xb0] sm:$0xff]
    %v127 = vld [vmem:[#allocation5 + $0xb8] sm:$0xff]
    %v128 = vld [vmem:[#allocation5 + $0xc0] sm:$0xff]
    %v129 = vld [vmem:[#allocation5 + $0xc8] sm:$0xff]
    %v130 = vld [vmem:[#allocation5 + $0xd0] sm:$0xff]
    %v131 = vld [vmem:[#allocation5 + $0xd8] sm:$0xff]
    %v132 = vld [vmem:[#allocation5 + $0xe0] sm:$0xff]
    %v133 = vld [vmem:[#allocation5 + $0xe8] sm:$0xff]
    %v134 = vld [vmem:[#allocation5 + $0xf0] sm:$0xff]
    %v135 = vld [vmem:[#allocation5 + $0xf8] sm:$0xff]
    %v136 = vld [vmem:[%s2] sm:$0x1]
    %v138 = vlaneseq
    %v139 = vshrl.u32 %v138, 7
    %v140 = vsub.s32 0, %v139
    %v141 = vrot.slane %v136, %v140
    %143 = vmatprep.subr.mxu0 0.0
    %144 = vmatpush1.msra.mxu0 %v119
    %145 = vmatprep.subr.mxu0 0.0
    %146 = vmatpush1.msra.mxu0 %v118
    %147 = vmatprep.subr.mxu0 0.0
    %148 = vmatpush1.msra.mxu0 %v117
    %149 = vmatprep.subr.mxu0 0.0
    %150 = vmatpush1.msra.mxu0 %v116
    %151 = vmatprep.subr.mxu0 0.0
    %152 = vmatpush1.msra.mxu0 %v115
    %153 = vmatprep.subr.mxu0 0.0
    %154 = vmatpush1.msra.mxu0 %v114
    %155 = vmatprep.subr.mxu0 0.0
    %156 = vmatpush1.msra.mxu0 %v113
    %157 = vmatprep.subr.mxu0 0.0
    %158 = vmatpush1.msra.mxu0 %v112
    %159 = vmatprep.subr.mxu0 0.0
    %160 = vmatpush1.msra.mxu0 %v111
    %161 = vmatprep.subr.mxu0 0.0
    %162 = vmatpush1.msra.mxu0 %v110
    %163 = vmatprep.subr.mxu0 0.0
    %164 = vmatpush1.msra.mxu0 %v109
    %165 = vmatprep.subr.mxu0 0.0
    %166 = vmatpush1.msra.mxu0 %v108
    %167 = vmatprep.subr.mxu0 0.0
    %168 = vmatpush1.msra.mxu0 %v107
    %169 = vmatprep.subr.mxu0 0.0
    %170 = vmatpush1.msra.mxu0 %v106
    %171 = vmatprep.subr.mxu0 0.0
    %172 = vmatpush1.msra.mxu0 %v105
    %173 = vmatprep.subr.mxu0 0.0
    %174 = vmatpush1.msra.mxu0 %v104
    %175 = vmatprep.subr.mxu0 0.0
    %176 = vmatpush2.msra.mxu0 %v135
    %177 = vmatprep.subr.mxu0 0.0
    %178 = vmatpush2.msra.mxu0 %v134
    %179 = vmatprep.subr.mxu0 0.0
    %180 = vmatpush2.msra.mxu0 %v133
    %181 = vmatprep.subr.mxu0 0.0
    %182 = vmatpush2.msra.mxu0 %v132
    %183 = vmatprep.subr.mxu0 0.0
    %184 = vmatpush2.msra.mxu0 %v131
    %185 = vmatprep.subr.mxu0 0.0
    %186 = vmatpush2.msra.mxu0 %v130
    %187 = vmatprep.subr.mxu0 0.0
    %188 = vmatpush2.msra.mxu0 %v129
    %189 = vmatprep.subr.mxu0 0.0
    %190 = vmatpush2.msra.mxu0 %v128
    %191 = vmatprep.subr.mxu0 0.0
    %192 = vmatpush2.msra.mxu0 %v127
    %193 = vmatprep.subr.mxu0 0.0
    %194 = vmatpush2.msra.mxu0 %v126
    %195 = vmatprep.subr.mxu0 0.0
    %196 = vmatpush2.msra.mxu0 %v125
    %197 = vmatprep.subr.mxu0 0.0
    %198 = vmatpush2.msra.mxu0 %v124
    %199 = vmatprep.subr.mxu0 0.0
    %200 = vmatpush2.msra.mxu0 %v123
    %201 = vmatprep.subr.mxu0 0.0
    %202 = vmatpush2.msra.mxu0 %v122
    %203 = vmatprep.subr.mxu0 0.0
    %204 = vmatpush2.msra.mxu0 %v121
    %205 = vmatprep.subr.mxu0 0.0
    %206 = vmatpush2.msra.mxu0 %v120
    %207 = vmatprep.mubr.f32.mxu0 %v103
    %208 = vmatmul.mubr.f32.gmra.mxu0 %v102
    %v209 = vpop.f32.mrf.mxu0
    %v210 = vadd.f32 %v141, %v209
    %v211 = vpop.f32.mrf.mxu0
    %212 = vdwg.mxu0
    %v213 = vmax.f32 %v210, 0.0
    %v214 = vld [vmem:[#allocation7] sm:$0xff]
    %v215 = vld [vmem:[#allocation7 + $0x8] sm:$0xff]
    %v216 = vld [vmem:[#allocation7 + $0x10] sm:$0xff]
    %v217 = vld [vmem:[#allocation7 + $0x18] sm:$0xff]
    %v218 = vld [vmem:[#allocation7 + $0x20] sm:$0xff]
    %v219 = vld [vmem:[#allocation7 + $0x28] sm:$0xff]
    %v220 = vld [vmem:[#allocation7 + $0x30] sm:$0xff]
    %v221 = vld [vmem:[#allocation7 + $0x38] sm:$0xff]
    %v222 = vld [vmem:[#allocation7 + $0x40] sm:$0xff]
    %v223 = vld [vmem:[#allocation7 + $0x48] sm:$0xff]
    %v224 = vld [vmem:[#allocation7 + $0x50] sm:$0xff]
    %v225 = vld [vmem:[#allocation7 + $0x58] sm:$0xff]
    %v226 = vld [vmem:[#allocation7 + $0x60] sm:$0xff]
    %v227 = vld [vmem:[#allocation7 + $0x68] sm:$0xff]
    %v228 = vld [vmem:[#allocation7 + $0x70] sm:$0xff]
    %v229 = vld [vmem:[#allocation7 + $0x78] sm:$0xff]
    %v230 = vld [vmem:[%s4] sm:$0x1]
    %v232 = vlaneseq
    %v233 = vshrl.u32 %v232, 7
    %v234 = vsub.s32 0, %v233
    %v235 = vrot.slane %v230, %v234
    %237 = vmatprep.subr.mxu0 0.0
    %238 = vmatpush1.msra.mxu0 %v229
    %239 = vmatprep.subr.mxu0 0.0
    %240 = vmatpush1.msra.mxu0 %v228
    %241 = vmatprep.subr.mxu0 0.0
    %242 = vmatpush1.msra.mxu0 %v227
    %243 = vmatprep.subr.mxu0 0.0
    %244 = vmatpush1.msra.mxu0 %v226
    %245 = vmatprep.subr.mxu0 0.0
    %246 = vmatpush1.msra.mxu0 %v225
    %247 = vmatprep.subr.mxu0 0.0
    %248 = vmatpush1.msra.mxu0 %v224
    %249 = vmatprep.subr.mxu0 0.0
    %250 = vmatpush1.msra.mxu0 %v223
    %251 = vmatprep.subr.mxu0 0.0
    %252 = vmatpush1.msra.mxu0 %v222
    %253 = vmatprep.subr.mxu0 0.0
    %254 = vmatpush1.msra.mxu0 %v221
    %255 = vmatprep.subr.mxu0 0.0
    %256 = vmatpush1.msra.mxu0 %v220
    %257 = vmatprep.subr.mxu0 0.0
    %258 = vmatpush1.msra.mxu0 %v219
    %259 = vmatprep.subr.mxu0 0.0
    %260 = vmatpush1.msra.mxu0 %v218
    %261 = vmatprep.subr.mxu0 0.0
    %262 = vmatpush1.msra.mxu0 %v217
    %263 = vmatprep.subr.mxu0 0.0
    %264 = vmatpush1.msra.mxu0 %v216
    %265 = vmatprep.subr.mxu0 0.0
    %266 = vmatpush1.msra.mxu0 %v215
    %267 = vmatprep.subr.mxu0 0.0
    %268 = vmatpush1.msra.mxu0 %v214
    %269 = vmatprep.subr.mxu0 0.0
    %270 = vmatpush2.msra.mxu0 0.0
    %271 = vmatprep.subr.mxu0 0.0
    %272 = vmatpush2.msra.mxu0 0.0
    %273 = vmatprep.subr.mxu0 0.0
    %274 = vmatpush2.msra.mxu0 0.0
    %275 = vmatprep.subr.mxu0 0.0
    %276 = vmatpush2.msra.mxu0 0.0
    %277 = vmatprep.subr.mxu0 0.0
    %278 = vmatpush2.msra.mxu0 0.0
    %279 = vmatprep.subr.mxu0 0.0
    %280 = vmatpush2.msra.mxu0 0.0
    %281 = vmatprep.subr.mxu0 0.0
    %282 = vmatpush2.msra.mxu0 0.0
    %283 = vmatprep.subr.mxu0 0.0
    %284 = vmatpush2.msra.mxu0 0.0
    %285 = vmatprep.subr.mxu0 0.0
    %286 = vmatpush2.msra.mxu0 0.0
    %287 = vmatprep.subr.mxu0 0.0
    %288 = vmatpush2.msra.mxu0 0.0
    %289 = vmatprep.subr.mxu0 0.0
    %290 = vmatpush2.msra.mxu0 0.0
    %291 = vmatprep.subr.mxu0 0.0
    %292 = vmatpush2.msra.mxu0 0.0
    %293 = vmatprep.subr.mxu0 0.0
    %294 = vmatpush2.msra.mxu0 0.0
    %295 = vmatprep.subr.mxu0 0.0
    %296 = vmatpush2.msra.mxu0 0.0
    %297 = vmatprep.subr.mxu0 0.0
    %298 = vmatpush2.msra.mxu0 0.0
    %299 = vmatprep.subr.mxu0 0.0
    %300 = vmatpush2.msra.mxu0 0.0
    %301 = vmatprep.mubr.f32.mxu0 0.0
    %302 = vmatmul.mubr.f32.gmra.mxu0 %v213
    %v303 = vpop.f32.mrf.mxu0
    %v304 = vadd.f32 %v235, %v303
    %v305 = vpop.f32.mrf.mxu0
    %306 = vdwg.mxu0
    %v307 = vld [vmem:[#allocation8] sm:$0xff]
    %v308 = vld [vmem:[#allocation8 + $0x8] sm:$0xff]
    %v309 = vld [vmem:[#allocation8 + $0x10] sm:$0xff]
    %v310 = vld [vmem:[#allocation8 + $0x18] sm:$0xff]
    %v311 = vld [vmem:[#allocation8 + $0x20] sm:$0xff]
    %v312 = vld [vmem:[#allocation8 + $0x28] sm:$0xff]
    %v313 = vld [vmem:[#allocation8 + $0x30] sm:$0xff]
    %v314 = vld [vmem:[#allocation8 + $0x38] sm:$0xff]
    %v315 = vld [vmem:[#allocation8 + $0x40] sm:$0xff]
    %v316 = vld [vmem:[#allocation8 + $0x48] sm:$0xff]
    %v317 = vld [vmem:[#allocation8 + $0x50] sm:$0xff]
    %v318 = vld [vmem:[#allocation8 + $0x58] sm:$0xff]
    %v319 = vld [vmem:[#allocation8 + $0x60] sm:$0xff]
    %v320 = vld [vmem:[#allocation8 + $0x68] sm:$0xff]
    %v321 = vld [vmem:[#allocation8 + $0x70] sm:$0xff]
    %v322 = vld [vmem:[#allocation8 + $0x78] sm:$0xff]
    %v323 = vld [vmem:[%s6] sm:$0x1]
    %v325 = vlaneseq
    %v326 = vshrl.u32 %v325, 7
    %v327 = vsub.s32 0, %v326
    %v328 = vrot.slane %v323, %v327
    %330 = vmatprep.subr.mxu0 0.0
    %331 = vmatpush1.msra.mxu0 %v322
    %332 = vmatprep.subr.mxu0 0.0
    %333 = vmatpush1.msra.mxu0 %v321
    %334 = vmatprep.subr.mxu0 0.0
    %335 = vmatpush1.msra.mxu0 %v320
    %336 = vmatprep.subr.mxu0 0.0
    %337 = vmatpush1.msra.mxu0 %v319
    %338 = vmatprep.subr.mxu0 0.0
    %339 = vmatpush1.msra.mxu0 %v318
    %340 = vmatprep.subr.mxu0 0.0
    %341 = vmatpush1.msra.mxu0 %v317
    %342 = vmatprep.subr.mxu0 0.0
    %343 = vmatpush1.msra.mxu0 %v316
    %344 = vmatprep.subr.mxu0 0.0
    %345 = vmatpush1.msra.mxu0 %v315
    %346 = vmatprep.subr.mxu0 0.0
    %347 = vmatpush1.msra.mxu0 %v314
    %348 = vmatprep.subr.mxu0 0.0
    %349 = vmatpush1.msra.mxu0 %v313
    %350 = vmatprep.subr.mxu0 0.0
    %351 = vmatpush1.msra.mxu0 %v312
    %352 = vmatprep.subr.mxu0 0.0
    %353 = vmatpush1.msra.mxu0 %v311
    %354 = vmatprep.subr.mxu0 0.0
    %355 = vmatpush1.msra.mxu0 %v310
    %356 = vmatprep.subr.mxu0 0.0
    %357 = vmatpush1.msra.mxu0 %v309
    %358 = vmatprep.subr.mxu0 0.0
    %359 = vmatpush1.msra.mxu0 %v308
    %360 = vmatprep.subr.mxu0 0.0
    %361 = vmatpush1.msra.mxu0 %v307
    %362 = vmatprep.subr.mxu0 0.0
    %363 = vmatpush2.msra.mxu0 0.0
    %364 = vmatprep.subr.mxu0 0.0
    %365 = vmatpush2.msra.mxu0 0.0
    %366 = vmatprep.subr.mxu0 0.0
    %367 = vmatpush2.msra.mxu0 0.0
    %368 = vmatprep.subr.mxu0 0.0
    %369 = vmatpush2.msra.mxu0 0.0
    %370 = vmatprep.subr.mxu0 0.0
    %371 = vmatpush2.msra.mxu0 0.0
    %372 = vmatprep.subr.mxu0 0.0
    %373 = vmatpush2.msra.mxu0 0.0
    %374 = vmatprep.subr.mxu0 0.0
    %375 = vmatpush2.msra.mxu0 0.0
    %376 = vmatprep.subr.mxu0 0.0
    %377 = vmatpush2.msra.mxu0 0.0
    %378 = vmatprep.subr.mxu0 0.0
    %379 = vmatpush2.msra.mxu0 0.0
    %380 = vmatprep.subr.mxu0 0.0
    %381 = vmatpush2.msra.mxu0 0.0
    %382 = vmatprep.subr.mxu0 0.0
    %383 = vmatpush2.msra.mxu0 0.0
    %384 = vmatprep.subr.mxu0 0.0
    %385 = vmatpush2.msra.mxu0 0.0
    %386 = vmatprep.subr.mxu0 0.0
    %387 = vmatpush2.msra.mxu0 0.0
    %388 = vmatprep.subr.mxu0 0.0
    %389 = vmatpush2.msra.mxu0 0.0
    %390 = vmatprep.subr.mxu0 0.0
    %391 = vmatpush2.msra.mxu0 0.0
    %392 = vmatprep.subr.mxu0 0.0
    %393 = vmatpush2.msra.mxu0 0.0
    %394 = vmatprep.mubr.f32.mxu0 0.0
    %395 = vmatmul.mubr.f32.gmra.mxu0 %v304
    %v396 = vpop.f32.mrf.mxu0
    %v397 = vadd.f32 %v328, %v396
    %v398 = vpop.f32.mrf.mxu0
    %399 = vdwg.mxu0
    %v400 = vmax.f32 %v397, 0.0
    %v401 = vld [vmem:[#allocation10] sm:$0xff]
    %v402 = vld [vmem:[#allocation10 + $0x8] sm:$0xff]
    %v403 = vld [vmem:[#allocation10 + $0x10] sm:$0xff]
    %v404 = vld [vmem:[#allocation10 + $0x18] sm:$0xff]
    %v405 = vld [vmem:[#allocation10 + $0x20] sm:$0xff]
    %v406 = vld [vmem:[#allocation10 + $0x28] sm:$0xff]
    %v407 = vld [vmem:[#allocation10 + $0x30] sm:$0xff]
    %v408 = vld [vmem:[#allocation10 + $0x38] sm:$0xff]
    %v409 = vld [vmem:[#allocation10 + $0x40] sm:$0xff]
    %v410 = vld [vmem:[#allocation10 + $0x48] sm:$0xff]
    %v411 = vld [vmem:[#allocation10 + $0x50] sm:$0xff]
    %v412 = vld [vmem:[#allocation10 + $0x58] sm:$0xff]
    %v413 = vld [vmem:[#allocation10 + $0x60] sm:$0xff]
    %v414 = vld [vmem:[#allocation10 + $0x68] sm:$0xff]
    %v415 = vld [vmem:[#allocation10 + $0x70] sm:$0xff]
    %v416 = vld [vmem:[#allocation10 + $0x78] sm:$0xff]
    %v417 = vld [vmem:[#allocation10 + $0x80] sm:$0xff]
    %v418 = vld [vmem:[#allocation10 + $0x88] sm:$0xff]
    %v419 = vld [vmem:[#allocation10 + $0x90] sm:$0xff]
    %v420 = vld [vmem:[#allocation10 + $0x98] sm:$0xff]
    %v421 = vld [vmem:[#allocation10 + $0xa0] sm:$0xff]
    %v422 = vld [vmem:[#allocation10 + $0xa8] sm:$0xff]
    %v423 = vld [vmem:[#allocation10 + $0xb0] sm:$0xff]
    %v424 = vld [vmem:[#allocation10 + $0xb8] sm:$0xff]
    %v425 = vld [vmem:[#allocation10 + $0xc0] sm:$0xff]
    %v426 = vld [vmem:[#allocation10 + $0xc8] sm:$0xff]
    %v427 = vld [vmem:[#allocation10 + $0xd0] sm:$0xff]
    %v428 = vld [vmem:[#allocation10 + $0xd8] sm:$0xff]
    %v429 = vld [vmem:[#allocation10 + $0xe0] sm:$0xff]
    %v430 = vld [vmem:[#allocation10 + $0xe8] sm:$0xff]
    %v431 = vld [vmem:[#allocation10 + $0xf0] sm:$0xff]
    %v432 = vld [vmem:[#allocation10 + $0xf8] sm:$0xff]
    %v433 = vld [vmem:[%s8] sm:$0x3]
    %v435 = vlaneseq
    %v436 = vshrl.u32 %v435, 7
    %v437 = vsub.s32 0, %v436
    %v438 = vrot.slane %v433, %v437
    %v439 = vlaneseq
    %v440 = vshrl.u32 %v439, 7
    %v441 = vsub.s32 1, %v440
    %v442 = vrot.slane %v433, %v441
    %445 = vmatprep.subr.mxu0 %v432
    %446 = vmatpush1.msra.mxu0 %v431
    %447 = vmatprep.subr.mxu0 %v430
    %448 = vmatpush1.msra.mxu0 %v429
    %449 = vmatprep.subr.mxu0 %v428
    %450 = vmatpush1.msra.mxu0 %v427
    %451 = vmatprep.subr.mxu0 %v426
    %452 = vmatpush1.msra.mxu0 %v425
    %453 = vmatprep.subr.mxu0 %v424
    %454 = vmatpush1.msra.mxu0 %v423
    %455 = vmatprep.subr.mxu0 %v422
    %456 = vmatpush1.msra.mxu0 %v421
    %457 = vmatprep.subr.mxu0 %v420
    %458 = vmatpush1.msra.mxu0 %v419
    %459 = vmatprep.subr.mxu0 %v418
    %460 = vmatpush1.msra.mxu0 %v417
    %461 = vmatprep.subr.mxu0 %v416
    %462 = vmatpush1.msra.mxu0 %v415
    %463 = vmatprep.subr.mxu0 %v414
    %464 = vmatpush1.msra.mxu0 %v413
    %465 = vmatprep.subr.mxu0 %v412
    %466 = vmatpush1.msra.mxu0 %v411
    %467 = vmatprep.subr.mxu0 %v410
    %468 = vmatpush1.msra.mxu0 %v409
    %469 = vmatprep.subr.mxu0 %v408
    %470 = vmatpush1.msra.mxu0 %v407
    %471 = vmatprep.subr.mxu0 %v406
    %472 = vmatpush1.msra.mxu0 %v405
    %473 = vmatprep.subr.mxu0 %v404
    %474 = vmatpush1.msra.mxu0 %v403
    %475 = vmatprep.subr.mxu0 %v402
    %476 = vmatpush1.msra.mxu0 %v401
    %477 = vmatprep.subr.mxu0 0.0
    %478 = vmatpush2.msra.mxu0 0.0
    %479 = vmatprep.subr.mxu0 0.0
    %480 = vmatpush2.msra.mxu0 0.0
    %481 = vmatprep.subr.mxu0 0.0
    %482 = vmatpush2.msra.mxu0 0.0
    %483 = vmatprep.subr.mxu0 0.0
    %484 = vmatpush2.msra.mxu0 0.0
    %485 = vmatprep.subr.mxu0 0.0
    %486 = vmatpush2.msra.mxu0 0.0
    %487 = vmatprep.subr.mxu0 0.0
    %488 = vmatpush2.msra.mxu0 0.0
    %489 = vmatprep.subr.mxu0 0.0
    %490 = vmatpush2.msra.mxu0 0.0
    %491 = vmatprep.subr.mxu0 0.0
    %492 = vmatpush2.msra.mxu0 0.0
    %493 = vmatprep.subr.mxu0 0.0
    %494 = vmatpush2.msra.mxu0 0.0
    %495 = vmatprep.subr.mxu0 0.0
    %496 = vmatpush2.msra.mxu0 0.0
    %497 = vmatprep.subr.mxu0 0.0
    %498 = vmatpush2.msra.mxu0 0.0
    %499 = vmatprep.subr.mxu0 0.0
    %500 = vmatpush2.msra.mxu0 0.0
    %501 = vmatprep.subr.mxu0 0.0
    %502 = vmatpush2.msra.mxu0 0.0
    %503 = vmatprep.subr.mxu0 0.0
    %504 = vmatpush2.msra.mxu0 0.0
    %505 = vmatprep.subr.mxu0 0.0
    %506 = vmatpush2.msra.mxu0 0.0
    %507 = vmatprep.subr.mxu0 0.0
    %508 = vmatpush2.msra.mxu0 0.0
    %509 = vmatprep.mubr.f32.mxu0 0.0
    %510 = vmatmul.mubr.f32.gmra.mxu0 %v400
    %v511 = vpop.f32.mrf.mxu0
    %v512 = vadd.f32 %v438, %v511
    %v513 = vpop.f32.mrf.mxu0
    %v514 = vadd.f32 %v442, %v513
    %515 = vdwg.mxu0
    %516 = vst [vmem:[#allocation11] sm:$0xff] %v512
    %517 = vst [vmem:[#allocation11 + $0x8] sm:$0xff] %v514
    %vm518 = vcmask 80896
    %519 = vst.msk [vmem:[#allocation12] sm:$0xff] %vm518, %v304
    // Predicated region
    $region58: #{autoencoder_forward.1} parent=1 // pred_check
      _
    $region59: #{autoencoder_forward.1} parent=1 // pred_check_branch
      %521 = sbr.rel (0) target = $region61
    $region60: #{autoencoder_forward.1} parent=1 // pred_region
      %s523 = ssub.s32 256, 256
      %524 = vsyncadd [#allocation4], %s523
      %s526 = sshll.u32 [#allocation11], 4
      %s527 = int_to_ptr.vmem [resolvable:$true] %s526
      %529 = dma.vmem_to_hbm [thread:$0]  %s527, 256, %s9, [#allocation4]
    $region61: #{autoencoder_forward.1} parent=1 // pred_fallthru
      _
    // Predicated region
    $region62: #{autoencoder_forward.1} parent=1 // pred_check
      _
    $region63: #{autoencoder_forward.1} parent=1 // pred_check_branch
      %531 = sbr.rel (0) target = $region65
    $region64: #{autoencoder_forward.1} parent=1 // pred_region
      %s533 = ssub.s32 128, 128
      %534 = vsyncadd [#allocation13], %s533
      %s536 = sshll.u32 [#allocation12], 4
      %s537 = int_to_ptr.vmem [resolvable:$true] %s536
      %539 = dma.vmem_to_hbm [thread:$0]  %s537, 128, %s10, [#allocation13]
    $region65: #{autoencoder_forward.1} parent=1 // pred_fallthru
      _
    // Predicated region
    $region66: #{autoencoder_forward.1} parent=1 // pred_check
      _
    $region67: #{autoencoder_forward.1} parent=1 // pred_check_branch
      %541 = sbr.rel (0) target = $region69
    $region68: #{autoencoder_forward.1} parent=1 // pred_region
      %542 = dma.done [#allocation4], 256
    $region69: #{autoencoder_forward.1} parent=1 // pred_fallthru
      _
    // Predicated region
    $region70: #{autoencoder_forward.1} parent=1 // pred_check
      _
    $region71: #{autoencoder_forward.1} parent=1 // pred_check_branch
      %544 = sbr.rel (0) target = $region73
    $region72: #{autoencoder_forward.1} parent=1 // pred_region
      %545 = dma.done [#allocation13], 128
    $region73: #{autoencoder_forward.1} parent=1 // pred_fallthru
      _
    %546 = vsyncpa [#allocation3], 1
    %547 = vsyncpa [#allocation6], 1
    %548 = vsyncpa [#allocation9], 1
    %549 = vsyncpa [#allocation4], 1
    %550 = vsyncpa [#allocation13], 1

</llo_original>
